<compile_context>
chip_gen: v5e
topology: v5e:2x2
jax: 0.10.0
libtpu: 0.0.40
codegen_flags: <defaults>
</compile_context>

<pallas_src>
import functools
import math

import numpy as np

import jax
import jax.numpy as jnp
from jax.experimental import pallas as pl
from jax.experimental.pallas import tpu as pltpu


LANE = 128        # last-dim tiling granularity (vreg lanes)
SUBLANE = 8       # second-to-last-dim granularity (vreg sublanes)
MAX_B_TILE = 512  # per-step batch tile cap (sweet spot for mem-bound streaming)


def _round_up(x, m):
    return ((x + m - 1) // m) * m


def _apply_act(y, activation):
    if activation == "tanh":
        return jnp.tanh(y)
    if activation == "relu":
        return jnp.maximum(y, 0.0)
    return y  # identity


# ---------------------------------------------------------------------------
# One-time probe: does this JAX support single-buffering grid-invariant blocks?
# ---------------------------------------------------------------------------
_SINGLE_BUFFER_OK = None


def _probe_single_buffer():
    global _SINGLE_BUFFER_OK
    if _SINGLE_BUFFER_OK is not None:
        return _SINGLE_BUFFER_OK

    def _copy_kernel(x_ref, o_ref):
        o_ref[...] = x_ref[...]

    try:
        spec = pl.BlockSpec((SUBLANE, LANE), lambda i: (0, 0),
                            pipeline_mode=pl.Buffered(1))
        out = pl.pallas_call(
            _copy_kernel,
            out_shape=jax.ShapeDtypeStruct((SUBLANE, LANE), jnp.float32),
            grid=(1,),
            in_specs=[spec],
            out_specs=pl.BlockSpec((SUBLANE, LANE), lambda i: (0, 0)),
        )(jnp.zeros((SUBLANE, LANE), jnp.float32))
        jax.block_until_ready(out)
        _SINGLE_BUFFER_OK = True
    except Exception:  # old JAX / unsupported lowering -> default double-buffer
        _SINGLE_BUFFER_OK = False
    return _SINGLE_BUFFER_OK


def _resident_spec(shape, single_buffer):
    """BlockSpec for a grid-invariant operand (weights/biases): one block that
    covers the whole array with a constant index_map, so it is DMA'd once and
    reused across all batch tiles. Single-buffered when supported."""
    idx_map = lambda i: (0,) * len(shape)
    if single_buffer:
        return pl.BlockSpec(shape, idx_map, pipeline_mode=pl.Buffered(1))
    return pl.BlockSpec(shape, idx_map)


# ---------------------------------------------------------------------------
# Fused kernel: all layers of the requested head(s) for one batch tile.
# ---------------------------------------------------------------------------
def _mlp_kernel(*refs, n_pi, n_vf, fuse_first, pi_split, activation):
    # refs layout:
    #   x_ref,
    #   [w0_cat, b0_cat]                     if fuse_first (layer 0 of BOTH heads),
    #   remaining pi (w, b) pairs, remaining vf (w, b) pairs,
    #   out_ref                              -- (b_tile, pi_out_p + vf_out_p)
    x_ref = refs[0]
    idx = 1
    if fuse_first:
        w0_ref, b0_ref = refs[idx], refs[idx + 1]
        idx += 2
        n_pi_rest, n_vf_rest = n_pi - 1, n_vf - 1
    else:
        n_pi_rest, n_vf_rest = n_pi, n_vf

    pi_pairs = [(refs[idx + 2 * l], refs[idx + 2 * l + 1]) for l in range(n_pi_rest)]
    idx += 2 * n_pi_rest
    vf_pairs = [(refs[idx + 2 * l], refs[idx + 2 * l + 1]) for l in range(n_vf_rest)]
    idx += 2 * n_vf_rest
    out_ref = refs[idx]

    def linear_act(h, w_ref, b_ref):
        # (b_tile, K) @ (K, N) on the MXU, f32 accumulation; bias broadcast.
        y = jnp.dot(h, w_ref[...], preferred_element_type=jnp.float32)
        y = y + b_ref[...]
        return _apply_act(y, activation)   # padded lanes stay exactly zero

    x = x_ref[...]  # loaded once, shared by both heads

    if fuse_first:
        h0 = linear_act(x, w0_ref, b0_ref)         # one MXU pass for both layer 0s
        h_pi, h_vf = h0[:, :pi_split], h0[:, pi_split:]
    else:
        h_pi = h_vf = x

    col = 0
    if n_pi > 0:
        h = h_pi
        for w_ref, b_ref in pi_pairs:
            h = linear_act(h, w_ref, b_ref)
        w = h.shape[-1]
        out_ref[:, col:col + w] = h.astype(out_ref.dtype)
        col += w
    if n_vf > 0:
        h = h_vf
        for w_ref, b_ref in vf_pairs:
            h = linear_act(h, w_ref, b_ref)
        w = h.shape[-1]
        out_ref[:, col:col + w] = h.astype(out_ref.dtype)


# ---------------------------------------------------------------------------
# Jitted forward implementation (pallas_call + in-graph slices).
# ---------------------------------------------------------------------------
def _forward_impl(params, features, *, n_pi, n_vf, fuse_first, pi_split,
                  pi_out_p, vf_out_p, latent_pi, latent_vf, feature_dim,
                  activation, flops_per_row, transc_per_row, single_buffer):
    B, F = features.shape
    if F != feature_dim:
        raise ValueError(f"expected feature dim {feature_dim}, got {F}")

    out_total = pi_out_p + vf_out_p

    # Batch tile: large for streaming throughput (per-grid-step overhead ~0.35us),
    # but keep >= 2 grid steps once B >= 16 so both v7x TensorCores get work.
    b_tile = min(MAX_B_TILE, _round_up(max(B, 1), SUBLANE))
    if B >= 2 * SUBLANE and pl.cdiv(B, b_tile) < 2:
        b_tile = _round_up(pl.cdiv(B, 2), SUBLANE)
    if pl.cdiv(B, b_tile) == 1:
        b_tile = B  # single full-extent block: no OOB rows, no divisibility need
    grid = (pl.cdiv(B, b_tile),)

    in_specs = [pl.BlockSpec((b_tile, F), lambda i: (i, 0))]
    for p in params:
        in_specs.append(_resident_spec(p.shape, single_buffer))
    out_spec = pl.BlockSpec((b_tile, out_total), lambda i: (i, 0))

    itemsize = jnp.dtype(features.dtype).itemsize
    param_bytes = sum(int(p.size) * jnp.dtype(p.dtype).itemsize for p in params)
    cost = pl.CostEstimate(
        flops=int(flops_per_row) * int(B),
        transcendentals=int(transc_per_row) * int(B),
        bytes_accessed=int(param_bytes + B * (F + out_total) * itemsize),
    )

    # VMEM budget: double-buffered x/out tiles + resident weights + headroom.
    # Raise v5e's 16 MiB default; stay within v7x's 64 MiB per-core VMEM.
    wb_copies = 1 if single_buffer else 2
    vmem_est = 2 * b_tile * (F + out_total) * 4 + wb_copies * param_bytes + (4 << 20)
    vmem_limit = int(min(max(vmem_est, 32 << 20), 64 << 20))

    kernel = functools.partial(
        _mlp_kernel, n_pi=n_pi, n_vf=n_vf, fuse_first=fuse_first,
        pi_split=pi_split, activation=activation)

    out = pl.pallas_call(
        kernel,
        out_shape=jax.ShapeDtypeStruct((B, out_total), features.dtype),
        grid=grid,
        in_specs=in_specs,
        out_specs=out_spec,
        compiler_params=pltpu.CompilerParams(
            dimension_semantics=("parallel",),
            vmem_limit_bytes=vmem_limit,
        ),
        cost_estimate=cost,
    )(features, *params)

    pi_lat = out[:, :latent_pi] if n_pi > 0 else None
    vf_lat = out[:, pi_out_p:pi_out_p + latent_vf] if n_vf > 0 else None
    return pi_lat, vf_lat


# ---------------------------------------------------------------------------
# MlpExtractor: parameter construction + fused, jitted forward
# ---------------------------------------------------------------------------
class MlpExtractor:
    def __init__(self, feature_dim, net_arch, activation="tanh", key=None):
        assert activation in ("tanh", "relu", "identity")
        if key is None:
            key = jax.random.PRNGKey(0)
        self.activation = activation
        self.feature_dim = int(feature_dim)

        if isinstance(net_arch, dict):
            pi_dims = [int(d) for d in net_arch.get("pi", [])]
            vf_dims = [int(d) for d in net_arch.get("vf", [])]
        else:
            pi_dims = vf_dims = [int(d) for d in net_arch]
        self.pi_dims, self.vf_dims = pi_dims, vf_dims

        key_pi, key_vf = jax.random.split(key)
        self.pi_params, self._pi_pad, self.latent_dim_pi = self._build_net(pi_dims, key_pi)
        self.vf_params, self._vf_pad, self.latent_dim_vf = self._build_net(vf_dims, key_vf)

        # Fused layer-0: both heads consume the same features, so their first
        # Linear layers are concatenated along N into one MXU matmul.
        if self._pi_pad and self._vf_pad:
            self._w0_cat = jnp.concatenate([self._pi_pad[0][0], self._vf_pad[0][0]], axis=1)
            self._b0_cat = jnp.concatenate([self._pi_pad[0][1], self._vf_pad[0][1]], axis=1)
        else:
            self._w0_cat = self._b0_cat = None

        self._runners = {}  # (run_pi, run_vf) -> (jitted fn, params tuple)

    # ------------------------------------------------------------------
    def _build_net(self, dims, key):
        """Returns (PyTorch-layout params, padded kernel-layout params, latent dim)."""
        raw, padded = [], []
        in_dim = self.feature_dim
        in_p = self.feature_dim  # layer 0 keeps the true feature dim (no K padding)
        for d in dims:
            key, kw, kb = jax.random.split(key, 3)
            bound = 1.0 / math.sqrt(in_dim)
            w = jax.random.uniform(kw, (d, in_dim), jnp.float32, -bound, bound)
            b = jax.random.uniform(kb, (d,), jnp.float32, -bound, bound)
            raw.append((w, b))

            np_ = _round_up(d, LANE)
            w_t = jnp.zeros((in_p, np_), jnp.float32).at[:in_dim, :d].set(w.T)
            b_p = jnp.zeros((1, np_), jnp.float32).at[0, :d].set(b)
            padded.append((w_t, b_p))

            in_dim, in_p = d, np_  # deeper layers: K padded to previous 128-wide N
        return raw, padded, in_dim

    def _chain_cost(self, dims):
        flops, tr, prev = 0, 0, self.feature_dim
        for d in dims:
            flops += 2 * prev * d
            tr += d
            prev = d
        return flops, tr

    def _build_runner(self, run_pi, run_vf):
        n_pi = len(self._pi_pad) if run_pi else 0
        n_vf = len(self._vf_pad) if run_vf else 0
        fuse_first = n_pi > 0 and n_vf > 0

        params, pi_split = [], 0
        if fuse_first:
            params += [self._w0_cat, self._b0_cat]
            pi_split = self._pi_pad[0][0].shape[1]
            for w, b in self._pi_pad[1:]:
                params += [w, b]
            for w, b in self._vf_pad[1:]:
                params += [w, b]
        elif n_pi > 0:
            for w, b in self._pi_pad:
                params += [w, b]
        elif n_vf > 0:
            for w, b in self._vf_pad:
                params += [w, b]

        pi_out_p = self._pi_pad[-1][0].shape[1] if n_pi > 0 else 0
        vf_out_p = self._vf_pad[-1][0].shape[1] if n_vf > 0 else 0

        flops = tr = 0
        if n_pi > 0:
            f, t = self._chain_cost(self.pi_dims)
            flops += f
            tr += t
        if n_vf > 0:
            f, t = self._chain_cost(self.vf_dims)
            flops += f
            tr += t
        if self.activation != "tanh":
            tr = 0

        fn = jax.jit(functools.partial(
            _forward_impl,
            n_pi=n_pi, n_vf=n_vf, fuse_first=fuse_first, pi_split=pi_split,
            pi_out_p=pi_out_p, vf_out_p=vf_out_p,
            latent_pi=self.latent_dim_pi, latent_vf=self.latent_dim_vf,
            feature_dim=self.feature_dim, activation=self.activation,
            flops_per_row=flops, transc_per_row=tr,
            single_buffer=_probe_single_buffer(),
        ))
        return fn, tuple(params)

    def _runner(self, run_pi, run_vf):
        mode = (bool(run_pi), bool(run_vf))
        if mode not in self._runners:
            self._runners[mode] = self._build_runner(*mode)
        return self._runners[mode]

    # ------------------------------------------------------------------
    def forward(self, features):
        has_pi, has_vf = bool(self._pi_pad), bool(self._vf_pad)
        if not has_pi and not has_vf:
            return features, features
        fn, params = self._runner(has_pi, has_vf)
        pi_lat, vf_lat = fn(params, features)
        return (pi_lat if pi_lat is not None else features,
                vf_lat if vf_lat is not None else features)

    def forward_actor(self, features):
        if not self._pi_pad:
            return features
        fn, params = self._runner(True, False)
        return fn(params, features)[0]

    def forward_critic(self, features):
        if not self._vf_pad:
            return features
        fn, params = self._runner(False, True)
        return fn(params, features)[1]


# ---------------------------------------------------------------------------
# Pure-numpy (float64) reference for correctness checking
# ---------------------------------------------------------------------------
def _reference_forward(extractor, features):
    feats = np.asarray(features, dtype=np.float64)

    def act(y):
        if extractor.activation == "tanh":
            return np.tanh(y)
        if extractor.activation == "relu":
            return np.maximum(y, 0.0)
        return y

    def run(params, h):
        for w, b in params:
            h = act(h @ np.asarray(w, np.float64).T + np.asarray(b, np.float64))
        return h

    return run(extractor.pi_params, feats), run(extractor.vf_params, feats)


if __name__ == "__main__":
    key = jax.random.PRNGKey(0)
    k_feat, k_feat2, k_params = jax.random.split(key, 3)

    feature_dim = 32
    net_arch = {"pi": [64, 32], "vf": [64, 64]}
    extractor = MlpExtractor(feature_dim, net_arch, activation="tanh", key=k_params)

    # Small batch (single full-extent block).
    features = jax.random.normal(k_feat, (2, feature_dim), jnp.float32)
    latent_pi, latent_vf = extractor.forward(features)
    latent_pi = jax.block_until_ready(latent_pi)
    latent_vf = jax.block_until_ready(latent_vf)
    assert latent_pi.shape == (2, extractor.latent_dim_pi)
    assert latent_vf.shape == (2, extractor.latent_dim_vf)

    ref_pi, ref_vf = _reference_forward(extractor, features)
    assert jnp.allclose(latent_pi, ref_pi, atol=1e-4, rtol=1e-4), "pi mismatch"
    assert jnp.allclose(latent_vf, ref_vf, atol=1e-4, rtol=1e-4), "vf mismatch"

    # Head-selective paths (only the requested head is computed).
    pi_only = jax.block_until_ready(extractor.forward_actor(features))
    vf_only = jax.block_until_ready(extractor.forward_critic(features))
    assert jnp.allclose(pi_only, ref_pi, atol=1e-4, rtol=1e-4), "actor mismatch"
    assert jnp.allclose(vf_only, ref_vf, atol=1e-4, rtol=1e-4), "critic mismatch"

    # Multi-tile batch with a remainder block (no-host-padding path, grid >= 2).
    features2 = jax.random.normal(k_feat2, (19, feature_dim), jnp.float32)
    lp2, lv2 = extractor.forward(features2)
    lp2 = jax.block_until_ready(lp2)
    lv2 = jax.block_until_ready(lv2)
    ref_pi2, ref_vf2 = _reference_forward(extractor, features2)
    assert jnp.allclose(lp2, ref_pi2, atol=1e-4, rtol=1e-4), "pi mismatch (tiled)"
    assert jnp.allclose(lv2, ref_vf2, atol=1e-4, rtol=1e-4), "vf mismatch (tiled)"

    print("KERNEL_OK")
</pallas_src>

<mosaic_0001>
module attributes {stable_mosaic.version = 11 : i64} {
  func.func @_copy_kernel(%arg0: i32, %arg1: memref<8x128xf32, #tpu.memory_space<vmem>>, %arg2: memref<8x128xf32, #tpu.memory_space<vmem>>) attributes {dimension_semantics = [#tpu.dimension_semantics<arbitrary>], iteration_bounds = array<i64: 1>, scalar_prefetch = 0 : i64, scratch_operands = 0 : i64, tpu.core_type = #tpu.core_type<tc>, window_params = [{pipeline_mode = #tpu.pipeline_mode<synchronous>, transform_indices = @transform_0, window_bounds = array<i64: 8, 128>}, {pipeline_mode = #tpu.pipeline_mode<synchronous>, transform_indices = @transform_1, window_bounds = array<i64: 8, 128>}]} {
    %c0 = arith.constant 0 : index
    %c0_0 = arith.constant 0 : index
    %0 = vector.load %arg1[%c0, %c0_0] : memref<8x128xf32, #tpu.memory_space<vmem>>, vector<8x128xf32>
    %c0_1 = arith.constant 0 : index
    %c0_2 = arith.constant 0 : index
    %1 = vector.load %arg2[%c0_1, %c0_2] : memref<8x128xf32, #tpu.memory_space<vmem>>, vector<8x128xf32>
    tpu.vector_store %arg2[%c0_1, %c0_2], %0 {strides = array<i32>} : memref<8x128xf32, #tpu.memory_space<vmem>>, vector<8x128xf32>,
    return
  }
  func.func @transform_0(%arg0: i32) -> (i32, i32) {
    %c0_i32 = arith.constant 0 : i32
    %c0_i32_0 = arith.constant 0 : i32
    %c0_i32_1 = arith.constant 0 : i32
    return %c0_i32, %c0_i32_0 : i32, i32
  }
  func.func @transform_1(%arg0: i32) -> (i32, i32) {
    %c0_i32 = arith.constant 0 : i32
    %c0_i32_0 = arith.constant 0 : i32
    %c0_i32_1 = arith.constant 0 : i32
    return %c0_i32, %c0_i32_0 : i32, i32
  }
}

module attributes {stable_mosaic.version = 11 : i64} {
  func.func @_mlp_kernel(%arg0: i32, %arg1: memref<2x32xf32, #tpu.memory_space<vmem>>, %arg2: memref<32x256xf32, #tpu.memory_space<vmem>>, %arg3: memref<1x256xf32, #tpu.memory_space<vmem>>, %arg4: memref<128x128xf32, #tpu.memory_space<vmem>>, %arg5: memref<1x128xf32, #tpu.memory_space<vmem>>, %arg6: memref<128x128xf32, #tpu.memory_space<vmem>>, %arg7: memref<1x128xf32, #tpu.memory_space<vmem>>, %arg8: memref<2x256xf32, #tpu.memory_space<vmem>>) attributes {dimension_semantics = [#tpu.dimension_semantics<parallel>], iteration_bounds = array<i64: 1>, scalar_prefetch = 0 : i64, scratch_operands = 0 : i64, tpu.core_type = #tpu.core_type<tc>, window_params = [{transform_indices = @transform_0, window_bounds = array<i64: 2, 32>}, {pipeline_mode = #tpu.pipeline_mode<synchronous>, transform_indices = @transform_1, window_bounds = array<i64: 32, 256>}, {pipeline_mode = #tpu.pipeline_mode<synchronous>, transform_indices = @transform_2, window_bounds = array<i64: 1, 256>}, {pipeline_mode = #tpu.pipeline_mode<synchronous>, transform_indices = @transform_3, window_bounds = array<i64: 128, 128>}, {pipeline_mode = #tpu.pipeline_mode<synchronous>, transform_indices = @transform_4, window_bounds = array<i64: 1, 128>}, {pipeline_mode = #tpu.pipeline_mode<synchronous>, transform_indices = @transform_5, window_bounds = array<i64: 128, 128>}, {pipeline_mode = #tpu.pipeline_mode<synchronous>, transform_indices = @transform_6, window_bounds = array<i64: 1, 128>}, {transform_indices = @transform_7, window_bounds = array<i64: 2, 256>}]} {
    %c0 = arith.constant 0 : index
    %c0_0 = arith.constant 0 : index
    %0 = vector.load %arg1[%c0, %c0_0] : memref<2x32xf32, #tpu.memory_space<vmem>>, vector<2x32xf32>
    %c0_1 = arith.constant 0 : index
    %c0_2 = arith.constant 0 : index
    %1 = vector.load %arg2[%c0_1, %c0_2] : memref<32x256xf32, #tpu.memory_space<vmem>>, vector<32x256xf32>
    %cst = arith.constant dense<0.000000e+00> : vector<2x256xf32>
    %2 = tpu.matmul %0, %1, %cst {dimension_numbers = #tpu.dot_dimension_numbers<[1], [0], [0], [1], [0, 0, 1, 1], [], []>} : vector<2x32xf32>, vector<32x256xf32>, vector<2x256xf32> -> vector<2x256xf32>
    %c0_3 = arith.constant 0 : index
    %c0_4 = arith.constant 0 : index
    %3 = vector.load %arg3[%c0_3, %c0_4] : memref<1x256xf32, #tpu.memory_space<vmem>>, vector<1x256xf32>
    %4 = vector.broadcast %3 : vector<1x256xf32> to vector<2x256xf32>
    %5 = arith.addf %2, %4 : vector<2x256xf32>
    %6 = math.tanh %5 : vector<2x256xf32>
    %7 = vector.extract_strided_slice %6 {offsets = [0, 0], sizes = [2, 128], strides = [1, 1]} : vector<2x256xf32> to vector<2x128xf32>
    %8 = vector.extract_strided_slice %6 {offsets = [0, 128], sizes = [2, 128], strides = [1, 1]} : vector<2x256xf32> to vector<2x128xf32>
    %c0_5 = arith.constant 0 : index
    %c0_6 = arith.constant 0 : index
    %9 = vector.load %arg4[%c0_5, %c0_6] : memref<128x128xf32, #tpu.memory_space<vmem>>, vector<128x128xf32>
    %cst_7 = arith.constant dense<0.000000e+00> : vector<2x128xf32>
    %10 = tpu.matmul %7, %9, %cst_7 {dimension_numbers = #tpu.dot_dimension_numbers<[1], [0], [0], [1], [0, 0, 1, 1], [], []>} : vector<2x128xf32>, vector<128x128xf32>, vector<2x128xf32> -> vector<2x128xf32>
    %c0_8 = arith.constant 0 : index
    %c0_9 = arith.constant 0 : index
    %11 = vector.load %arg5[%c0_8, %c0_9] : memref<1x128xf32, #tpu.memory_space<vmem>>, vector<1x128xf32>
    %12 = vector.broadcast %11 : vector<1x128xf32> to vector<2x128xf32>
    %13 = arith.addf %10, %12 : vector<2x128xf32>
    %14 = math.tanh %13 : vector<2x128xf32>
    %c0_10 = arith.constant 0 : index
    %c0_11 = arith.constant 0 : index
    %15 = vector.load %arg8[%c0_10, %c0_11] : memref<2x256xf32, #tpu.memory_space<vmem>>, vector<2x128xf32>
    tpu.vector_store %arg8[%c0_10, %c0_11], %14 {strides = array<i32>} : memref<2x256xf32, #tpu.memory_space<vmem>>, vector<2x128xf32>,
    %c0_12 = arith.constant 0 : index
    %c0_13 = arith.constant 0 : index
    %16 = vector.load %arg6[%c0_12, %c0_13] : memref<128x128xf32, #tpu.memory_space<vmem>>, vector<128x128xf32>
    %cst_14 = arith.constant dense<0.000000e+00> : vector<2x128xf32>
    %17 = tpu.matmul %8, %16, %cst_14 {dimension_numbers = #tpu.dot_dimension_numbers<[1], [0], [0], [1], [0, 0, 1, 1], [], []>} : vector<2x128xf32>, vector<128x128xf32>, vector<2x128xf32> -> vector<2x128xf32>
    %c0_15 = arith.constant 0 : index
    %c0_16 = arith.constant 0 : index
    %18 = vector.load %arg7[%c0_15, %c0_16] : memref<1x128xf32, #tpu.memory_space<vmem>>, vector<1x128xf32>
    %19 = vector.broadcast %18 : vector<1x128xf32> to vector<2x128xf32>
    %20 = arith.addf %17, %19 : vector<2x128xf32>
    %21 = math.tanh %20 : vector<2x128xf32>
    %c0_17 = arith.constant 0 : index
    %c128 = arith.constant 128 : index
    %22 = vector.load %arg8[%c0_17, %c128] : memref<2x256xf32, #tpu.memory_space<vmem>>, vector<2x128xf32>
    tpu.vector_store %arg8[%c0_17, %c128], %21 {strides = array<i32>} : memref<2x256xf32, #tpu.memory_space<vmem>>, vector<2x128xf32>,
    return
  }
  func.func @transform_0(%arg0: i32) -> (i32, i32) {
    %c0_i32 = arith.constant 0 : i32
    %c0_i32_0 = arith.constant 0 : i32
    return %arg0, %c0_i32 : i32, i32
  }
  func.func @transform_1(%arg0: i32) -> (i32, i32) {
    %c0_i32 = arith.constant 0 : i32
    %c0_i32_0 = arith.constant 0 : i32
    %c0_i32_1 = arith.constant 0 : i32
    return %c0_i32, %c0_i32_0 : i32, i32
  }
  func.func @transform_2(%arg0: i32) -> (i32, i32) {
    %c0_i32 = arith.constant 0 : i32
    %c0_i32_0 = arith.constant 0 : i32
    %c0_i32_1 = arith.constant 0 : i32
    return %c0_i32, %c0_i32_0 : i32, i32
  }
  func.func @transform_3(%arg0: i32) -> (i32, i32) {
    %c0_i32 = arith.constant 0 : i32
    %c0_i32_0 = arith.constant 0 : i32
    %c0_i32_1 = arith.constant 0 : i32
    return %c0_i32, %c0_i32_0 : i32, i32
  }
  func.func @transform_4(%arg0: i32) -> (i32, i32) {
    %c0_i32 = arith.constant 0 : i32
    %c0_i32_0 = arith.constant 0 : i32
    %c0_i32_1 = arith.constant 0 : i32
    return %c0_i32, %c0_i32_0 : i32, i32
  }
  func.func @transform_5(%arg0: i32) -> (i32, i32) {
    %c0_i32 = arith.constant 0 : i32
    %c0_i32_0 = arith.constant 0 : i32
    %c0_i32_1 = arith.constant 0 : i32
    return %c0_i32, %c0_i32_0 : i32, i32
  }
  func.func @transform_6(%arg0: i32) -> (i32, i32) {
    %c0_i32 = arith.constant 0 : i32
    %c0_i32_0 = arith.constant 0 : i32
    %c0_i32_1 = arith.constant 0 : i32
    return %c0_i32, %c0_i32_0 : i32, i32
  }
  func.func @transform_7(%arg0: i32) -> (i32, i32) {
    %c0_i32 = arith.constant 0 : i32
    %c0_i32_0 = arith.constant 0 : i32
    return %arg0, %c0_i32 : i32, i32
  }
}

</mosaic_0001>

<llo_original>
// kernel: tpu_custom_call.1
$region0: #{tpu_custom_call.1}
  #allocation0 [shape = 'u32[]', space=smem, size = 0x4, offset = 0x4, fixed_abs, tag = 'smem constant byte address 0x4 - core index']
  #allocation1 [shape = 'u32[72,128]{1,0:T(1,128)}', space=vmem, size = 0x9000, scoped, tag = 'internal scratch']
  %s0 = inlined_call_operand.hbm [shape: f32[8,128], index: 0, kind: input, shape index: {}]
  %s1 = inlined_call_operand.hbm [shape: f32[8,128], index: 1, kind: output, shape index: {}]
  %s2 = sld [smem:[#allocation0]]
  $region18: #{tpu_custom_call.1} parent=0
    _
  %s4 = ssub.s32 1, %s2
  %s5 = scalar_select 0, %s4, %s2
  $region1: #{tpu_custom_call.1} parent=0
    #allocation2 [shape = 'u8[4096]{0}', space=vmem, size = 0x1000, scoped, tag = 'input window, operand 0, single buffered']
    #allocation3 [shape = 's32[1]{0}', space=sflag, size = 0x4, scoped, tag = 'scoped memory for tpu_custom_call.1']
    #allocation4 [shape = 's32[1]{0}', space=sflag, size = 0x4, scoped, tag = 'scoped memory for tpu_custom_call.1']
    #allocation5 [shape = 'u8[4096]{0}', space=vmem, size = 0x1000, scoped, tag = 'output window, operand 0, single buffered']
    %6 = vsyncpa [#allocation3], 0
    %7 = vsyncpa [#allocation4], 0
    // Predicated region
    $region2: #{tpu_custom_call.1} parent=1 // pred_check
      _
    $region3: #{tpu_custom_call.1} parent=1 // pred_check_branch
      %9 = sbr.rel (0) target = $region5
    $region4: #{tpu_custom_call.1} parent=1 // pred_region
      %11 = vsyncadd [#allocation3], 0
      %s13 = sshll.u32 %s0, 4
      %s14 = int_to_ptr.hbm [resolvable:$true] %s13
      %s15 = sshll.u32 [#allocation2], 4
      %s16 = int_to_ptr.vmem [resolvable:$true] %s15
      %18 = dma.hbm_to_vmem [thread:$0]  %s14, 128, %s16, [#allocation3]
    $region5: #{tpu_custom_call.1} parent=1 // pred_fallthru
      _
    // Predicated region
    $region6: #{tpu_custom_call.1} parent=1 // pred_check
      _
    $region7: #{tpu_custom_call.1} parent=1 // pred_check_branch
      %20 = sbr.rel (0) target = $region9
    $region8: #{tpu_custom_call.1} parent=1 // pred_region
      %22 = dma.done [#allocation3], 128
    $region9: #{tpu_custom_call.1} parent=1 // pred_fallthru
      _
    %v23 = vld [vmem:[#allocation2] sm:$0xff]
    %24 = vst [vmem:[#allocation5] sm:$0xff] %v23
    // Predicated region
    $region10: #{tpu_custom_call.1} parent=1 // pred_check
      _
    $region11: #{tpu_custom_call.1} parent=1 // pred_check_branch
      %26 = sbr.rel (0) target = $region13
    $region12: #{tpu_custom_call.1} parent=1 // pred_region
      %28 = vsyncadd [#allocation4], 0
      %s30 = sshll.u32 [#allocation5], 4
      %s31 = int_to_ptr.vmem [resolvable:$true] %s30
      %s32 = sshll.u32 %s1, 4
      %s33 = int_to_ptr.hbm [resolvable:$true] %s32
      %35 = dma.vmem_to_hbm [thread:$0]  %s31, 128, %s33, [#allocation4]
    $region13: #{tpu_custom_call.1} parent=1 // pred_fallthru
      _
    // Predicated region
    $region14: #{tpu_custom_call.1} parent=1 // pred_check
      _
    $region15: #{tpu_custom_call.1} parent=1 // pred_check_branch
      %37 = sbr.rel (0) target = $region17
    $region16: #{tpu_custom_call.1} parent=1 // pred_region
      %39 = dma.done [#allocation4], 128
    $region17: #{tpu_custom_call.1} parent=1 // pred_fallthru
      _
    %40 = vsyncpa [#allocation3], 1
    %41 = vsyncpa [#allocation4], 1

// kernel: _forward_impl.1
$region0: #{_forward_impl.1}
  #allocation0 [shape = 'u32[]', space=smem, size = 0x4, offset = 0x4, fixed_abs, tag = 'smem constant byte address 0x4 - core index']
  #allocation1 [shape = 'u32[72,128]{1,0:T(1,128)}', space=vmem, size = 0x9000, scoped, tag = 'internal scratch']
  %s0 = inlined_call_operand.vmem [shape: f32[2,32], index: 0, kind: input, shape index: {}]
  %s1 = inlined_call_operand.hbm [shape: f32[32,256], index: 1, kind: input, shape index: {}]
  %s2 = inlined_call_operand.hbm [shape: f32[1,256], index: 2, kind: input, shape index: {}]
  %s3 = inlined_call_operand.hbm [shape: f32[128,128], index: 3, kind: input, shape index: {}]
  %s4 = inlined_call_operand.vmem [shape: f32[1,128], index: 4, kind: input, shape index: {}]
  %s5 = inlined_call_operand.hbm [shape: f32[128,128], index: 5, kind: input, shape index: {}]
  %s6 = inlined_call_operand.vmem [shape: f32[1,128], index: 6, kind: input, shape index: {}]
  %s7 = inlined_call_operand.vmem [shape: f32[2,256], index: 7, kind: output, shape index: {}]
  %s8 = sld [smem:[#allocation0]]
  $region54: #{_forward_impl.1} parent=0
    _
  %s10 = ssub.s32 1, %s8
  %s11 = scalar_select 0, %s10, %s8
  $region1: #{_forward_impl.1} parent=0
    #allocation2 [shape = 'u8[32768]{0}', space=vmem, size = 0x8000, scoped, tag = 'input window, operand 1, single buffered']
    #allocation3 [shape = 's32[1]{0}', space=sflag, size = 0x4, scoped, tag = 'scoped memory for _forward_impl.1']
    #allocation4 [shape = 'u8[1024]{0}', space=vmem, size = 0x400, scoped, tag = 'input window, operand 2, single buffered']
    #allocation5 [shape = 's32[1]{0}', space=sflag, size = 0x4, scoped, tag = 'scoped memory for _forward_impl.1']
    #allocation6 [shape = 'u8[65536]{0}', space=vmem, size = 0x10000, scoped, tag = 'input window, operand 3, single buffered']
    #allocation7 [shape = 'u8[65536]{0}', space=vmem, size = 0x10000, scoped, tag = 'input window, operand 5, single buffered']
    #allocation8 [shape = 's32[1]{0}', space=sflag, size = 0x4, scoped, tag = 'scoped memory for _forward_impl.1']
    %12 = vsyncpa [#allocation3], 0
    %13 = vsyncpa [#allocation5], 0
    %14 = vsyncpa [#allocation8], 0
    // Predicated region
    $region2: #{_forward_impl.1} parent=1 // pred_check
      _
    $region3: #{_forward_impl.1} parent=1 // pred_check_branch
      %16 = sbr.rel (0) target = $region5
    $region4: #{_forward_impl.1} parent=1 // pred_region
      _
    $region5: #{_forward_impl.1} parent=1 // pred_fallthru
      _
    // Predicated region
    $region6: #{_forward_impl.1} parent=1 // pred_check
      _
    $region7: #{_forward_impl.1} parent=1 // pred_check_branch
      %18 = sbr.rel (0) target = $region9
    $region8: #{_forward_impl.1} parent=1 // pred_region
      %20 = vsyncadd [#allocation3], 0
      %s21 = sshll.u32 %s1, 4
      %s22 = int_to_ptr.hbm [resolvable:$true] %s21
      %s23 = sshll.u32 [#allocation2], 4
      %s24 = int_to_ptr.vmem [resolvable:$true] %s23
      %29 = dma.hbm_to_vmem [thread:$0]  %s22, 1024, %s24, [#allocation3], 256, 256, 16
    $region9: #{_forward_impl.1} parent=1 // pred_fallthru
      _
    // Predicated region
    $region10: #{_forward_impl.1} parent=1 // pred_check
      _
    $region11: #{_forward_impl.1} parent=1 // pred_check_branch
      %31 = sbr.rel (0) target = $region13
    $region12: #{_forward_impl.1} parent=1 // pred_region
      %33 = vsyncadd [#allocation5], 0
      %s35 = sshll.u32 %s2, 4
      %s36 = int_to_ptr.hbm [resolvable:$true] %s35
      %s37 = sshll.u32 [#allocation4], 4
      %s38 = int_to_ptr.vmem [resolvable:$true] %s37
      %40 = dma.hbm_to_vmem [thread:$0]  %s36, 32, %s38, [#allocation5]
    $region13: #{_forward_impl.1} parent=1 // pred_fallthru
      _
    // Predicated region
    $region14: #{_forward_impl.1} parent=1 // pred_check
      _
    $region15: #{_forward_impl.1} parent=1 // pred_check_branch
      %42 = sbr.rel (0) target = $region17
    $region16: #{_forward_impl.1} parent=1 // pred_region
      %44 = vsyncadd [#allocation5], 0
      %s45 = sshll.u32 %s3, 4
      %s46 = int_to_ptr.hbm [resolvable:$true] %s45
      %s47 = sshll.u32 [#allocation6], 4
      %s48 = int_to_ptr.vmem [resolvable:$true] %s47
      %53 = dma.hbm_to_vmem [thread:$0]  %s46, 2048, %s48, [#allocation5], 128, 128, 8
    $region17: #{_forward_impl.1} parent=1 // pred_fallthru
      _
    // Predicated region
    $region18: #{_forward_impl.1} parent=1 // pred_check
      _
    $region19: #{_forward_impl.1} parent=1 // pred_check_branch
      %55 = sbr.rel (0) target = $region21
    $region20: #{_forward_impl.1} parent=1 // pred_region
      _
    $region21: #{_forward_impl.1} parent=1 // pred_fallthru
      _
    // Predicated region
    $region22: #{_forward_impl.1} parent=1 // pred_check
      _
    $region23: #{_forward_impl.1} parent=1 // pred_check_branch
      %57 = sbr.rel (0) target = $region25
    $region24: #{_forward_impl.1} parent=1 // pred_region
      %59 = vsyncadd [#allocation8], 0
      %s60 = sshll.u32 %s5, 4
      %s61 = int_to_ptr.hbm [resolvable:$true] %s60
      %s62 = sshll.u32 [#allocation7], 4
      %s63 = int_to_ptr.vmem [resolvable:$true] %s62
      %68 = dma.hbm_to_vmem [thread:$0]  %s61, 2048, %s63, [#allocation8], 128, 128, 8
    $region25: #{_forward_impl.1} parent=1 // pred_fallthru
      _
    // Predicated region
    $region26: #{_forward_impl.1} parent=1 // pred_check
      _
    $region27: #{_forward_impl.1} parent=1 // pred_check_branch
      %70 = sbr.rel (0) target = $region29
    $region28: #{_forward_impl.1} parent=1 // pred_region
      _
    $region29: #{_forward_impl.1} parent=1 // pred_fallthru
      _
    // Predicated region
    $region30: #{_forward_impl.1} parent=1 // pred_check
      _
    $region31: #{_forward_impl.1} parent=1 // pred_check_branch
      %72 = sbr.rel (0) target = $region33
    $region32: #{_forward_impl.1} parent=1 // pred_region
      %74 = dma.done [#allocation3], 1024
    $region33: #{_forward_impl.1} parent=1 // pred_fallthru
      _
    // Predicated region
    $region34: #{_forward_impl.1} parent=1 // pred_check
      _
    $region35: #{_forward_impl.1} parent=1 // pred_check_branch
      %76 = sbr.rel (0) target = $region37
    $region36: #{_forward_impl.1} parent=1 // pred_region
      %78 = dma.done [#allocation5], 32
    $region37: #{_forward_impl.1} parent=1 // pred_fallthru
      _
    // Predicated region
    $region38: #{_forward_impl.1} parent=1 // pred_check
      _
    $region39: #{_forward_impl.1} parent=1 // pred_check_branch
      %80 = sbr.rel (0) target = $region41
    $region40: #{_forward_impl.1} parent=1 // pred_region
      %82 = dma.done [#allocation5], 2048
    $region41: #{_forward_impl.1} parent=1 // pred_fallthru
      _
    // Predicated region
    $region42: #{_forward_impl.1} parent=1 // pred_check
      _
    $region43: #{_forward_impl.1} parent=1 // pred_check_branch
      %84 = sbr.rel (0) target = $region45
    $region44: #{_forward_impl.1} parent=1 // pred_region
      %86 = dma.done [#allocation8], 2048
    $region45: #{_forward_impl.1} parent=1 // pred_fallthru
      _
    %v87 = vld [vmem:[%s0] sm:$0x3]
    %v88 = vld [vmem:[#allocation2] sm:$0xff]
    %v89 = vld [vmem:[#allocation2 + $0x8] sm:$0xff]
    %v90 = vld [vmem:[#allocation2 + $0x10] sm:$0xff]
    %v91 = vld [vmem:[#allocation2 + $0x18] sm:$0xff]
    %v92 = vld [vmem:[#allocation2 + $0x20] sm:$0xff]
    %v93 = vld [vmem:[#allocation2 + $0x28] sm:$0xff]
    %v94 = vld [vmem:[#allocation2 + $0x30] sm:$0xff]
    %v95 = vld [vmem:[#allocation2 + $0x38] sm:$0xff]
    %v96 = vld [vmem:[#allocation4] sm:$0x3]
    %v98 = vperm.slane %v96, 0
    %v99 = vperm.slane %v96, 1
    %vm102 = vcmask 261120
    %v104 = vsel %vm102, %v87, 0
    %106 = vmatpush.msra.mxu0 0.0
    %107 = vmatpush.msra.mxu0 0.0
    %108 = vmatpush.msra.mxu0 0.0
    %109 = vmatpush.msra.mxu0 0.0
    %110 = vmatpush.msra.mxu0 0.0
    %111 = vmatpush.msra.mxu0 0.0
    %112 = vmatpush.msra.mxu0 0.0
    %113 = vmatpush.msra.mxu0 0.0
    %114 = vmatpush.msra.mxu0 0.0
    %115 = vmatpush.msra.mxu0 0.0
    %116 = vmatpush.msra.mxu0 0.0
    %117 = vmatpush.msra.mxu0 0.0
    %118 = vmatpush.msra.mxu0 %v94
    %119 = vmatpush.msra.mxu0 %v92
    %120 = vmatpush.msra.mxu0 %v90
    %121 = vmatpush.msra.mxu0 %v88
    %122 = vmatmul.f32.gmra.mxu0 %v104
    %v123 = vpop.f32.mrf.mxu0
    %v124 = vadd.f32 %v98, %v123
    %125 = vdwg.mxu0
    %126 = vmatpush.msra.mxu0 0.0
    %127 = vmatpush.msra.mxu0 0.0
    %128 = vmatpush.msra.mxu0 0.0
    %129 = vmatpush.msra.mxu0 0.0
    %130 = vmatpush.msra.mxu0 0.0
    %131 = vmatpush.msra.mxu0 0.0
    %132 = vmatpush.msra.mxu0 0.0
    %133 = vmatpush.msra.mxu0 0.0
    %134 = vmatpush.msra.mxu0 0.0
    %135 = vmatpush.msra.mxu0 0.0
    %136 = vmatpush.msra.mxu0 0.0
    %137 = vmatpush.msra.mxu0 0.0
    %138 = vmatpush.msra.mxu0 %v95
    %139 = vmatpush.msra.mxu0 %v93
    %140 = vmatpush.msra.mxu0 %v91
    %141 = vmatpush.msra.mxu0 %v89
    %142 = vmatmul.f32.gmra.mxu0 %v104
    %v143 = vpop.f32.mrf.mxu0
    %v144 = vadd.f32 %v99, %v143
    %145 = vdwg.mxu0
    %v146 = vtanh.pop %v124
    %v147 = vtanh.pop %v144
    %v148 = vld [vmem:[#allocation6] sm:$0xff]
    %v149 = vld [vmem:[#allocation6 + $0x8] sm:$0xff]
    %v150 = vld [vmem:[#allocation6 + $0x10] sm:$0xff]
    %v151 = vld [vmem:[#allocation6 + $0x18] sm:$0xff]
    %v152 = vld [vmem:[#allocation6 + $0x20] sm:$0xff]
    %v153 = vld [vmem:[#allocation6 + $0x28] sm:$0xff]
    %v154 = vld [vmem:[#allocation6 + $0x30] sm:$0xff]
    %v155 = vld [vmem:[#allocation6 + $0x38] sm:$0xff]
    %v156 = vld [vmem:[#allocation6 + $0x40] sm:$0xff]
    %v157 = vld [vmem:[#allocation6 + $0x48] sm:$0xff]
    %v158 = vld [vmem:[#allocation6 + $0x50] sm:$0xff]
    %v159 = vld [vmem:[#allocation6 + $0x58] sm:$0xff]
    %v160 = vld [vmem:[#allocation6 + $0x60] sm:$0xff]
    %v161 = vld [vmem:[#allocation6 + $0x68] sm:$0xff]
    %v162 = vld [vmem:[#allocation6 + $0x70] sm:$0xff]
    %v163 = vld [vmem:[#allocation6 + $0x78] sm:$0xff]
    %v164 = vld [vmem:[%s4] sm:$0x1]
    %v166 = vperm.slane %v164, 0
    %168 = vmatpush.msra.mxu0 %v163
    %169 = vmatpush.msra.mxu0 %v162
    %170 = vmatpush.msra.mxu0 %v161
    %171 = vmatpush.msra.mxu0 %v160
    %172 = vmatpush.msra.mxu0 %v159
    %173 = vmatpush.msra.mxu0 %v158
    %174 = vmatpush.msra.mxu0 %v157
    %175 = vmatpush.msra.mxu0 %v156
    %176 = vmatpush.msra.mxu0 %v155
    %177 = vmatpush.msra.mxu0 %v154
    %178 = vmatpush.msra.mxu0 %v153
    %179 = vmatpush.msra.mxu0 %v152
    %180 = vmatpush.msra.mxu0 %v151
    %181 = vmatpush.msra.mxu0 %v150
    %182 = vmatpush.msra.mxu0 %v149
    %183 = vmatpush.msra.mxu0 %v148
    %184 = vmatmul.f32.gmra.mxu0 %v146
    %v185 = vpop.f32.mrf.mxu0
    %v186 = vadd.f32 %v166, %v185
    %187 = vdwg.mxu0
    %v188 = vtanh.pop %v186
    %189 = vst [vmem:[%s7] sm:$0x3] %v188
    %v190 = vld [vmem:[#allocation7] sm:$0xff]
    %v191 = vld [vmem:[#allocation7 + $0x8] sm:$0xff]
    %v192 = vld [vmem:[#allocation7 + $0x10] sm:$0xff]
    %v193 = vld [vmem:[#allocation7 + $0x18] sm:$0xff]
    %v194 = vld [vmem:[#allocation7 + $0x20] sm:$0xff]
    %v195 = vld [vmem:[#allocation7 + $0x28] sm:$0xff]
    %v196 = vld [vmem:[#allocation7 + $0x30] sm:$0xff]
    %v197 = vld [vmem:[#allocation7 + $0x38] sm:$0xff]
    %v198 = vld [vmem:[#allocation7 + $0x40] sm:$0xff]
    %v199 = vld [vmem:[#allocation7 + $0x48] sm:$0xff]
    %v200 = vld [vmem:[#allocation7 + $0x50] sm:$0xff]
    %v201 = vld [vmem:[#allocation7 + $0x58] sm:$0xff]
    %v202 = vld [vmem:[#allocation7 + $0x60] sm:$0xff]
    %v203 = vld [vmem:[#allocation7 + $0x68] sm:$0xff]
    %v204 = vld [vmem:[#allocation7 + $0x70] sm:$0xff]
    %v205 = vld [vmem:[#allocation7 + $0x78] sm:$0xff]
    %v206 = vld [vmem:[%s6] sm:$0x1]
    %v208 = vperm.slane %v206, 0
    %210 = vmatpush.msra.mxu0 %v205
    %211 = vmatpush.msra.mxu0 %v204
    %212 = vmatpush.msra.mxu0 %v203
    %213 = vmatpush.msra.mxu0 %v202
    %214 = vmatpush.msra.mxu0 %v201
    %215 = vmatpush.msra.mxu0 %v200
    %216 = vmatpush.msra.mxu0 %v199
    %217 = vmatpush.msra.mxu0 %v198
    %218 = vmatpush.msra.mxu0 %v197
    %219 = vmatpush.msra.mxu0 %v196
    %220 = vmatpush.msra.mxu0 %v195
    %221 = vmatpush.msra.mxu0 %v194
    %222 = vmatpush.msra.mxu0 %v193
    %223 = vmatpush.msra.mxu0 %v192
    %224 = vmatpush.msra.mxu0 %v191
    %225 = vmatpush.msra.mxu0 %v190
    %226 = vmatmul.f32.gmra.mxu0 %v147
    %v227 = vpop.f32.mrf.mxu0
    %v228 = vadd.f32 %v208, %v227
    %229 = vdwg.mxu0
    %v230 = vtanh.pop %v228
    %231 = vst [vmem:[%s7 + $0x2] sm:$0x3] %v230
    // Predicated region
    $region46: #{_forward_impl.1} parent=1 // pred_check
      _
    $region47: #{_forward_impl.1} parent=1 // pred_check_branch
      %233 = sbr.rel (0) target = $region49
    $region48: #{_forward_impl.1} parent=1 // pred_region
      _
    $region49: #{_forward_impl.1} parent=1 // pred_fallthru
      _
    // Predicated region
    $region50: #{_forward_impl.1} parent=1 // pred_check
      _
    $region51: #{_forward_impl.1} parent=1 // pred_check_branch
      %235 = sbr.rel (0) target = $region53
    $region52: #{_forward_impl.1} parent=1 // pred_region
      _
    $region53: #{_forward_impl.1} parent=1 // pred_fallthru
      _
    %236 = vsyncpa [#allocation3], 1
    %237 = vsyncpa [#allocation5], 1
    %238 = vsyncpa [#allocation8], 1

</llo_original>
